<compile_context>
chip_gen: v5e
topology: v5e:2x2
jax: 0.10.0
libtpu: 0.0.40
codegen_flags: <defaults>
</compile_context>

<pallas_src>
import functools

import jax
import jax.numpy as jnp
import numpy as np
from jax.experimental import pallas as pl
from jax.experimental.pallas import tpu as pltpu


# ---------------------------------------------------------------------------------------
# VMEM budgeting helpers
# ---------------------------------------------------------------------------------------
def _vmem_budget_bytes():
    """Per-chip scoped-VMEM ceiling (~3/4 of physical VMEM): ~96 MiB on v5e/v6e
    (128 MiB parts), ~48 MiB on v7x (64 MiB). Falls back to the v7x-safe value if the
    hardware query is unavailable."""
    try:
        phys = int(pltpu.get_tpu_info().vmem_capacity_bytes)
    except Exception:
        phys = 64 * 1024 * 1024
    return (phys * 3) // 4


def _choose_td(n, d_pad, g_bytes, e_itemsize, budget):
    """Largest latent-column block (multiple of 128 dividing d_pad) whose footprint
    (single-buffered G + double-buffered E0-in and light-out blocks) fits the budget."""
    n_lanes = d_pad // 128
    for m in range(n_lanes, 0, -1):
        if n_lanes % m:
            continue
        td = m * 128
        if g_bytes + 4 * n * td * e_itemsize + (1 << 20) <= budget:
            return td
    return 128


def _invariant_block_spec(shape, index_map):
    """Grid-invariant operand: single-buffered pipelined block (1x VMEM copy; DMA issued
    by the pipeline prologue and overlapped with the other operands' prefetch). Falls
    back to a default (double-buffered) BlockSpec on jax versions without pipeline_mode;
    the constant index_map still prevents any re-fetch across grid steps."""
    try:
        return pl.BlockSpec(shape, index_map, pipeline_mode=pl.Buffered(1))
    except TypeError:
        return pl.BlockSpec(shape, index_map)


# ---------------------------------------------------------------------------------------
# Kernel 1 (fused): multi-layer LightGCN propagation + layer mean + gather/score epilogue
# Grid is over latent-dim column blocks; G is a grid-invariant single-buffered block.
# ---------------------------------------------------------------------------------------
def _fused_propagate_score_kernel(u_idx_ref, i_idx_ref,      # scalar prefetch (SMEM)
                                  g_ref, e_ref,              # inputs (VMEM blocks)
                                  light_ref, gamma_ref,      # outputs (VMEM blocks)
                                  gamma_acc,                 # VMEM scratch (B, 1) f32
                                  *, n_layers):
    j = pl.program_id(0)

    @pl.when(j == 0)
    def _():
        gamma_acc[...] = jnp.zeros_like(gamma_acc)

    # --- LightGCN propagation on this latent-column block: mean_{l=0..L} G^l @ E0[:, blk]
    g = g_ref[...]                               # native dtype (f32 or bf16) -> MXU rate
    e0 = e_ref[...]
    acc = e0.astype(jnp.float32)                 # f32 layer-mean accumulator (exact E0 term)
    emb = e0.astype(g.dtype)                     # matmul operands follow the graph dtype
    for _ in range(n_layers):                    # static, small layer count
        emb_f32 = jnp.dot(g, emb, preferred_element_type=jnp.float32)   # MXU, f32 accum
        acc = acc + emb_f32
        emb = emb_f32.astype(g.dtype)
    light = acc * (1.0 / float(n_layers + 1))
    light_ref[...] = light.astype(light_ref.dtype)

    # --- fused score epilogue: gamma[b] += <light[u_b, blk], light[i_b, blk]> -----------
    # Indices live in SMEM (scalar prefetch); the gather is 2B dynamic (1, td) row loads
    # plus a VPU multiply and lane reduce -- no one-hot builds, no tiny MXU matmuls, no
    # second pallas_call, and no HBM write->readback of the propagated table.
    batch = gamma_acc.shape[0]
    u_rows = [light_ref[pl.ds(u_idx_ref[b], 1), :] for b in range(batch)]
    i_rows = [light_ref[pl.ds(i_idx_ref[b], 1), :] for b in range(batch)]
    u_mat = jnp.concatenate(u_rows, axis=0).astype(jnp.float32)          # (B, td)
    i_mat = jnp.concatenate(i_rows, axis=0).astype(jnp.float32)          # (B, td)
    gamma_acc[...] += jnp.sum(u_mat * i_mat, axis=1, keepdims=True)

    @pl.when(j == pl.num_programs(0) - 1)
    def _():
        gamma_ref[...] = gamma_acc[...].astype(gamma_ref.dtype)


def lightgcn_forward_fused(graph, all_emb_padded, u_idx, i_idx, n_layers):
    """One pallas_call: propagation + layer mean + fused gather/score.
    Returns (light_out_padded (N, Dp), gamma (B,))."""
    N, Dp = all_emb_padded.shape
    assert graph.shape == (N, N)
    B = u_idx.shape[0]
    g_bytes = N * N * graph.dtype.itemsize
    e_size = all_emb_padded.dtype.itemsize
    budget = _vmem_budget_bytes()
    td = _choose_td(N, Dp, g_bytes, e_size, budget)
    vmem_limit = int(min(max(g_bytes + 4 * N * td * e_size + (2 << 20),
                             32 * 1024 * 1024), budget))

    # TODO(synk): for graphs too large for a resident (N, N) G block (N >~ 3-5k), this
    # must be restructured to stream G in (tm, tk) panels over an extra K grid axis with
    # a VMEM f32 accumulator; unnecessary at demo sizes.
    kernel = functools.partial(_fused_propagate_score_kernel, n_layers=n_layers)
    light, gamma = pl.pallas_call(
        kernel,
        out_shape=(jax.ShapeDtypeStruct((N, Dp), all_emb_padded.dtype),
                   jax.ShapeDtypeStruct((B, 1), jnp.float32)),
        grid_spec=pltpu.PrefetchScalarGridSpec(
            num_scalar_prefetch=2,                        # users / items -> SMEM
            grid=(Dp // td,),
            in_specs=[
                _invariant_block_spec((N, N), lambda j, u, i: (0, 0)),   # G, fetched once
                pl.BlockSpec((N, td), lambda j, u, i: (0, j)),           # E0 column block
            ],
            out_specs=[
                pl.BlockSpec((N, td), lambda j, u, i: (0, j)),           # light_out block
                pl.BlockSpec((B, 1), lambda j, u, i: (0, 0)),            # gamma (resident)
            ],
            scratch_shapes=[pltpu.VMEM((B, 1), jnp.float32)],            # gamma accumulator
        ),
        compiler_params=pltpu.CompilerParams(
            # gamma accumulates across latent-column blocks, so this axis is sequential.
            # (Typically Dp//td == 1; amortizing propagation over many scoring batches is
            # handled by the cached gather/score path below, not by multi-core splitting.)
            dimension_semantics=("arbitrary",),
            vmem_limit_bytes=vmem_limit,
        ),
        cost_estimate=pl.CostEstimate(
            flops=2 * n_layers * N * N * Dp + 4 * B * Dp,
            transcendentals=0,
            bytes_accessed=g_bytes + 2 * N * Dp * e_size + 3 * B * 4,
        ),
    )(u_idx, i_idx, graph, all_emb_padded)
    return light, gamma[:, 0]


# ---------------------------------------------------------------------------------------
# Kernel 2: gather + score against an already-propagated (cached) table
# ---------------------------------------------------------------------------------------
def _gather_score_kernel(u_idx_ref, i_idx_ref, table_ref, o_ref):
    batch = o_ref.shape[0]
    u_rows = [table_ref[pl.ds(u_idx_ref[b], 1), :] for b in range(batch)]
    i_rows = [table_ref[pl.ds(i_idx_ref[b], 1), :] for b in range(batch)]
    u_mat = jnp.concatenate(u_rows, axis=0).astype(jnp.float32)
    i_mat = jnp.concatenate(i_rows, axis=0).astype(jnp.float32)
    o_ref[...] = jnp.sum(u_mat * i_mat, axis=1, keepdims=True).astype(o_ref.dtype)


def lightgcn_gather_score(table, u_idx, i_idx):
    """Score a batch against a cached propagated table: SMEM indices + 2B dynamic row
    slices + VPU multiply / lane reduce (no one-hot matmul)."""
    # TODO(synk): for N where the (N, Dp) table exceeds a single VMEM block (N >~ 100k),
    # switch to a manual DMA row gather (memory_space=pl.ANY) bounding VMEM at O(B*Dp).
    N, Dp = table.shape
    B = u_idx.shape[0]
    out = pl.pallas_call(
        _gather_score_kernel,
        out_shape=jax.ShapeDtypeStruct((B, 1), jnp.float32),
        grid_spec=pltpu.PrefetchScalarGridSpec(
            num_scalar_prefetch=2,
            grid=(1,),
            in_specs=[pl.BlockSpec((N, Dp), lambda j, u, i: (0, 0))],
            out_specs=pl.BlockSpec((B, 1), lambda j, u, i: (0, 0)),
        ),
        compiler_params=pltpu.CompilerParams(dimension_semantics=("arbitrary",)),
        cost_estimate=pl.CostEstimate(
            flops=2 * B * Dp,
            transcendentals=0,
            bytes_accessed=N * Dp * table.dtype.itemsize + 3 * B * 4,
        ),
    )(u_idx, i_idx, table)
    return out[:, 0]


# ---------------------------------------------------------------------------------------
# Model wrapper (glue: concat, lane padding, light_out caching)
# ---------------------------------------------------------------------------------------
class CustomLightGCNPallas:
    """forward(users, items) matches torch CustomLightGCN.forward (inference path)."""

    def __init__(self, num_users, num_items, latent_dim, n_layers, graph,
                 user_weight, item_weight):
        self.num_users = num_users
        self.num_items = num_items
        self.latent_dim = latent_dim
        self.n_layers = n_layers
        self.graph = graph                                   # (N, N) normalized adjacency
        d_pad = ((latent_dim + 127) // 128) * 128            # lane-pad to full 128 lanes
        all_emb = jnp.concatenate([user_weight, item_weight], axis=0)
        if d_pad != latent_dim:
            # Zero pad columns are preserved exactly by propagation and add 0 to scores.
            all_emb = jnp.pad(all_emb, ((0, 0), (0, d_pad - latent_dim)))
        self.d_pad = d_pad
        self._all_emb_padded = all_emb
        self._light_out_cache = None                         # padded (N, d_pad) table

    def _indices(self, users, items):
        u = users.astype(jnp.int32).reshape(-1)
        i = items.astype(jnp.int32).reshape(-1) + self.num_users
        return u, i

    def computer(self):
        if self._light_out_cache is None:
            dummy = jnp.zeros((8,), jnp.int32)
            light, _ = lightgcn_forward_fused(self.graph, self._all_emb_padded,
                                              dummy, dummy, self.n_layers)
            self._light_out_cache = light
        light = self._light_out_cache[:, :self.latent_dim]
        return light[:self.num_users], light[self.num_users:]

    def forward(self, users, items):
        u_idx, i_idx = self._indices(users, items)
        if self._light_out_cache is not None:
            # Propagation is independent of (users, items): reuse the cached table and
            # only run the O(B*D) gather+score kernel.
            return lightgcn_gather_score(self._light_out_cache, u_idx, i_idx)
        light, gamma = lightgcn_forward_fused(self.graph, self._all_emb_padded,
                                              u_idx, i_idx, self.n_layers)
        self._light_out_cache = light
        return gamma


# ---------------------------------------------------------------------------------------
# Pure-JAX reference (unpadded)
# ---------------------------------------------------------------------------------------
def reference_light_out(graph, user_w, item_w, n_layers):
    all_emb = jnp.concatenate([user_w, item_w], axis=0)
    embs = [all_emb]
    emb = all_emb
    for _ in range(n_layers):
        emb = jnp.matmul(graph, emb, precision=jax.lax.Precision.HIGHEST)
        embs.append(emb)
    return jnp.mean(jnp.stack(embs, axis=1), axis=1)


def reference_gamma(light_out, num_users, users, items):
    return jnp.sum(light_out[users] * light_out[num_users + items], axis=1)


if __name__ == "__main__":
    # Small, TPU-friendly shapes
    num_users, num_items = 48, 80
    latent_dim, n_layers, batch = 64, 2, 8
    N = num_users + num_items                                # 128 graph nodes

    key = jax.random.PRNGKey(0)
    k_r, k_u, k_i, k_us, k_is, k_us2, k_is2 = jax.random.split(key, 7)

    # Deterministic synthetic interaction matrix -> symmetric-normalized adjacency
    R = (jax.random.uniform(k_r, (num_users, num_items)) < 0.15).astype(jnp.float32)
    A = jnp.zeros((N, N), jnp.float32)
    A = A.at[:num_users, num_users:].set(R)
    A = A.at[num_users:, :num_users].set(R.T)
    deg = jnp.sum(A, axis=1)
    d_inv_sqrt = jnp.where(deg > 0, 1.0 / jnp.sqrt(deg), 0.0)
    graph_f32 = d_inv_sqrt[:, None] * A * d_inv_sqrt[None, :]

    # Embedding init: nn.init.normal_(std=0.01)
    user_w = 0.01 * jax.random.normal(k_u, (num_users, latent_dim), jnp.float32)
    item_w = 0.01 * jax.random.normal(k_i, (num_items, latent_dim), jnp.float32)

    # Two scoring batches of (user, item) index pairs
    users = jax.random.randint(k_us, (batch,), 0, num_users)
    items = jax.random.randint(k_is, (batch,), 0, num_items)
    users2 = jax.random.randint(k_us2, (batch,), 0, num_users)
    items2 = jax.random.randint(k_is2, (batch,), 0, num_items)

    # ---- f32 graph: fused propagate+score, then cached gather+score, then computer() ---
    model = CustomLightGCNPallas(num_users, num_items, latent_dim, n_layers,
                                 graph_f32, user_w, item_w)
    gamma1 = jax.block_until_ready(model.forward(users, items))      # fused kernel
    gamma2 = jax.block_until_ready(model.forward(users2, items2))    # cached gather kernel
    all_u, all_i = model.computer()
    all_u = jax.block_until_ready(all_u)

    light_ref = reference_light_out(graph_f32, user_w, item_w, n_layers)
    np.testing.assert_allclose(
        np.asarray(gamma1),
        np.asarray(reference_gamma(light_ref, num_users, users, items)),
        rtol=2e-3, atol=3e-5)
    np.testing.assert_allclose(
        np.asarray(gamma2),
        np.asarray(reference_gamma(light_ref, num_users, users2, items2)),
        rtol=2e-3, atol=3e-5)
    np.testing.assert_allclose(
        np.asarray(jnp.concatenate([all_u, all_i], axis=0)),
        np.asarray(light_ref), rtol=2e-3, atol=1e-4)

    # ---- bf16 graph (recommended production dtype): bf16 MXU path, looser tolerance ----
    graph_bf16 = graph_f32.astype(jnp.bfloat16)
    model_bf16 = CustomLightGCNPallas(num_users, num_items, latent_dim, n_layers,
                                      graph_bf16, user_w, item_w)
    gamma_bf16 = jax.block_until_ready(model_bf16.forward(users, items))
    light_ref_q = reference_light_out(graph_bf16.astype(jnp.float32),
                                      user_w, item_w, n_layers)
    np.testing.assert_allclose(
        np.asarray(gamma_bf16),
        np.asarray(reference_gamma(light_ref_q, num_users, users, items)),
        rtol=5e-2, atol=3e-5)

    # TODO(synk): the torch.sparse graph dropout path (__dropout_x) is training-only and
    # intentionally not reproduced; inference uses the full graph as in the reference.
    print("KERNEL_OK")
</pallas_src>

<mosaic_0001>
module attributes {stable_mosaic.version = 11 : i64} {
  func.func @_fused_propagate_score_kernel(%arg0: i32, %arg1: memref<8xi32, #tpu.memory_space<smem>>, %arg2: memref<8xi32, #tpu.memory_space<smem>>, %arg3: memref<128x128xf32, #tpu.memory_space<vmem>>, %arg4: memref<128x128xf32, #tpu.memory_space<vmem>>, %arg5: memref<128x128xf32, #tpu.memory_space<vmem>>, %arg6: memref<8x1xf32, #tpu.memory_space<vmem>>, %arg7: memref<8x1xf32, #tpu.memory_space<vmem>>) attributes {dimension_semantics = [#tpu.dimension_semantics<arbitrary>], iteration_bounds = array<i64: 1>, scalar_prefetch = 2 : i64, scratch_operands = 1 : i64, tpu.core_type = #tpu.core_type<tc>, window_params = [{pipeline_mode = #tpu.pipeline_mode<synchronous>, transform_indices = @transform_0, window_bounds = array<i64: 128, 128>}, {transform_indices = @transform_1, window_bounds = array<i64: 128, 128>}, {transform_indices = @transform_2, window_bounds = array<i64: 128, 128>}, {pipeline_mode = #tpu.pipeline_mode<synchronous>, transform_indices = @transform_3, window_bounds = array<i64: 8, 1>}]} {
    %c0_i32 = arith.constant 0 : i32
    %0 = arith.cmpi eq, %arg0, %c0_i32 : i32
    %1 = arith.extui %0 : i1 to i32
    %c0_i32_0 = arith.constant 0 : i32
    %2 = arith.cmpi ne, %1, %c0_i32_0 : i32
    scf.if %2 {
      %cst_40 = arith.constant 0.000000e+00 : f32
      %71 = vector.broadcast %cst_40 : f32 to vector<8x1xf32>
      %c0_41 = arith.constant 0 : index
      %c0_42 = arith.constant 0 : index
      %72 = vector.load %arg7[%c0_41, %c0_42] : memref<8x1xf32, #tpu.memory_space<vmem>>, vector<8x1xf32>
      tpu.vector_store %arg7[%c0_41, %c0_42], %71 {strides = array<i32>} : memref<8x1xf32, #tpu.memory_space<vmem>>, vector<8x1xf32>,
    } else {
    }
    %c0 = arith.constant 0 : index
    %c0_1 = arith.constant 0 : index
    %3 = vector.load %arg3[%c0, %c0_1] : memref<128x128xf32, #tpu.memory_space<vmem>>, vector<128x128xf32>
    %c0_2 = arith.constant 0 : index
    %c0_3 = arith.constant 0 : index
    %4 = vector.load %arg4[%c0_2, %c0_3] : memref<128x128xf32, #tpu.memory_space<vmem>>, vector<128x128xf32>
    %cst = arith.constant dense<0.000000e+00> : vector<128x128xf32>
    %5 = tpu.matmul %3, %4, %cst {dimension_numbers = #tpu.dot_dimension_numbers<[1], [0], [0], [1], [0, 0, 1, 1], [], []>} : vector<128x128xf32>, vector<128x128xf32>, vector<128x128xf32> -> vector<128x128xf32>
    %6 = arith.addf %4, %5 : vector<128x128xf32>
    %cst_4 = arith.constant dense<0.000000e+00> : vector<128x128xf32>
    %7 = tpu.matmul %3, %5, %cst_4 {dimension_numbers = #tpu.dot_dimension_numbers<[1], [0], [0], [1], [0, 0, 1, 1], [], []>} : vector<128x128xf32>, vector<128x128xf32>, vector<128x128xf32> -> vector<128x128xf32>
    %8 = arith.addf %6, %7 : vector<128x128xf32>
    %cst_5 = arith.constant 0.333333343 : f32
    %9 = vector.broadcast %cst_5 : f32 to vector<128x128xf32>
    %10 = arith.mulf %8, %9 : vector<128x128xf32>
    %c0_6 = arith.constant 0 : index
    %c0_7 = arith.constant 0 : index
    %11 = vector.load %arg5[%c0_6, %c0_7] : memref<128x128xf32, #tpu.memory_space<vmem>>, vector<128x128xf32>
    tpu.vector_store %arg5[%c0_6, %c0_7], %10 {strides = array<i32>} : memref<128x128xf32, #tpu.memory_space<vmem>>, vector<128x128xf32>,
    %c0_8 = arith.constant 0 : index
    %12 = memref.load %arg1[%c0_8] : memref<8xi32, #tpu.memory_space<smem>>
    %13 = arith.index_cast %12 : i32 to index
    %c0_9 = arith.constant 0 : index
    %14 = vector.load %arg5[%13, %c0_9] : memref<128x128xf32, #tpu.memory_space<vmem>>, vector<1x128xf32>
    %c1 = arith.constant 1 : index
    %15 = memref.load %arg1[%c1] : memref<8xi32, #tpu.memory_space<smem>>
    %16 = arith.index_cast %15 : i32 to index
    %c0_10 = arith.constant 0 : index
    %17 = vector.load %arg5[%16, %c0_10] : memref<128x128xf32, #tpu.memory_space<vmem>>, vector<1x128xf32>
    %c2 = arith.constant 2 : index
    %18 = memref.load %arg1[%c2] : memref<8xi32, #tpu.memory_space<smem>>
    %19 = arith.index_cast %18 : i32 to index
    %c0_11 = arith.constant 0 : index
    %20 = vector.load %arg5[%19, %c0_11] : memref<128x128xf32, #tpu.memory_space<vmem>>, vector<1x128xf32>
    %c3 = arith.constant 3 : index
    %21 = memref.load %arg1[%c3] : memref<8xi32, #tpu.memory_space<smem>>
    %22 = arith.index_cast %21 : i32 to index
    %c0_12 = arith.constant 0 : index
    %23 = vector.load %arg5[%22, %c0_12] : memref<128x128xf32, #tpu.memory_space<vmem>>, vector<1x128xf32>
    %c4 = arith.constant 4 : index
    %24 = memref.load %arg1[%c4] : memref<8xi32, #tpu.memory_space<smem>>
    %25 = arith.index_cast %24 : i32 to index
    %c0_13 = arith.constant 0 : index
    %26 = vector.load %arg5[%25, %c0_13] : memref<128x128xf32, #tpu.memory_space<vmem>>, vector<1x128xf32>
    %c5 = arith.constant 5 : index
    %27 = memref.load %arg1[%c5] : memref<8xi32, #tpu.memory_space<smem>>
    %28 = arith.index_cast %27 : i32 to index
    %c0_14 = arith.constant 0 : index
    %29 = vector.load %arg5[%28, %c0_14] : memref<128x128xf32, #tpu.memory_space<vmem>>, vector<1x128xf32>
    %c6 = arith.constant 6 : index
    %30 = memref.load %arg1[%c6] : memref<8xi32, #tpu.memory_space<smem>>
    %31 = arith.index_cast %30 : i32 to index
    %c0_15 = arith.constant 0 : index
    %32 = vector.load %arg5[%31, %c0_15] : memref<128x128xf32, #tpu.memory_space<vmem>>, vector<1x128xf32>
    %c7 = arith.constant 7 : index
    %33 = memref.load %arg1[%c7] : memref<8xi32, #tpu.memory_space<smem>>
    %34 = arith.index_cast %33 : i32 to index
    %c0_16 = arith.constant 0 : index
    %35 = vector.load %arg5[%34, %c0_16] : memref<128x128xf32, #tpu.memory_space<vmem>>, vector<1x128xf32>
    %c0_17 = arith.constant 0 : index
    %36 = memref.load %arg2[%c0_17] : memref<8xi32, #tpu.memory_space<smem>>
    %37 = arith.index_cast %36 : i32 to index
    %c0_18 = arith.constant 0 : index
    %38 = vector.load %arg5[%37, %c0_18] : memref<128x128xf32, #tpu.memory_space<vmem>>, vector<1x128xf32>
    %c1_19 = arith.constant 1 : index
    %39 = memref.load %arg2[%c1_19] : memref<8xi32, #tpu.memory_space<smem>>
    %40 = arith.index_cast %39 : i32 to index
    %c0_20 = arith.constant 0 : index
    %41 = vector.load %arg5[%40, %c0_20] : memref<128x128xf32, #tpu.memory_space<vmem>>, vector<1x128xf32>
    %c2_21 = arith.constant 2 : index
    %42 = memref.load %arg2[%c2_21] : memref<8xi32, #tpu.memory_space<smem>>
    %43 = arith.index_cast %42 : i32 to index
    %c0_22 = arith.constant 0 : index
    %44 = vector.load %arg5[%43, %c0_22] : memref<128x128xf32, #tpu.memory_space<vmem>>, vector<1x128xf32>
    %c3_23 = arith.constant 3 : index
    %45 = memref.load %arg2[%c3_23] : memref<8xi32, #tpu.memory_space<smem>>
    %46 = arith.index_cast %45 : i32 to index
    %c0_24 = arith.constant 0 : index
    %47 = vector.load %arg5[%46, %c0_24] : memref<128x128xf32, #tpu.memory_space<vmem>>, vector<1x128xf32>
    %c4_25 = arith.constant 4 : index
    %48 = memref.load %arg2[%c4_25] : memref<8xi32, #tpu.memory_space<smem>>
    %49 = arith.index_cast %48 : i32 to index
    %c0_26 = arith.constant 0 : index
    %50 = vector.load %arg5[%49, %c0_26] : memref<128x128xf32, #tpu.memory_space<vmem>>, vector<1x128xf32>
    %c5_27 = arith.constant 5 : index
    %51 = memref.load %arg2[%c5_27] : memref<8xi32, #tpu.memory_space<smem>>
    %52 = arith.index_cast %51 : i32 to index
    %c0_28 = arith.constant 0 : index
    %53 = vector.load %arg5[%52, %c0_28] : memref<128x128xf32, #tpu.memory_space<vmem>>, vector<1x128xf32>
    %c6_29 = arith.constant 6 : index
    %54 = memref.load %arg2[%c6_29] : memref<8xi32, #tpu.memory_space<smem>>
    %55 = arith.index_cast %54 : i32 to index
    %c0_30 = arith.constant 0 : index
    %56 = vector.load %arg5[%55, %c0_30] : memref<128x128xf32, #tpu.memory_space<vmem>>, vector<1x128xf32>
    %c7_31 = arith.constant 7 : index
    %57 = memref.load %arg2[%c7_31] : memref<8xi32, #tpu.memory_space<smem>>
    %58 = arith.index_cast %57 : i32 to index
    %c0_32 = arith.constant 0 : index
    %59 = vector.load %arg5[%58, %c0_32] : memref<128x128xf32, #tpu.memory_space<vmem>>, vector<1x128xf32>
    %60 = tpu.concatenate %14, %17, %20, %23, %26, %29, %32, %35 in 0 : vector<1x128xf32>, vector<1x128xf32>, vector<1x128xf32>, vector<1x128xf32>, vector<1x128xf32>, vector<1x128xf32>, vector<1x128xf32>, vector<1x128xf32> -> vector<8x128xf32>
    %61 = tpu.concatenate %38, %41, %44, %47, %50, %53, %56, %59 in 0 : vector<1x128xf32>, vector<1x128xf32>, vector<1x128xf32>, vector<1x128xf32>, vector<1x128xf32>, vector<1x128xf32>, vector<1x128xf32>, vector<1x128xf32> -> vector<8x128xf32>
    %c0_33 = arith.constant 0 : index
    %c0_34 = arith.constant 0 : index
    %62 = vector.load %arg7[%c0_33, %c0_34] : memref<8x1xf32, #tpu.memory_space<vmem>>, vector<8x1xf32>
    %63 = arith.mulf %60, %61 : vector<8x128xf32>
    %cst_35 = arith.constant dense<0.000000e+00> : vector<8xf32>
    %64 = vector.multi_reduction <add>, %63, %cst_35 [1] : vector<8x128xf32> to vector<8xf32>
    %65 = vector.shape_cast %64 : vector<8xf32> to vector<8x1xf32>
    %66 = arith.addf %62, %65 : vector<8x1xf32>
    %c0_36 = arith.constant 0 : index
    %c0_37 = arith.constant 0 : index
    %67 = vector.load %arg7[%c0_36, %c0_37] : memref<8x1xf32, #tpu.memory_space<vmem>>, vector<8x1xf32>
    tpu.vector_store %arg7[%c0_36, %c0_37], %66 {strides = array<i32>} : memref<8x1xf32, #tpu.memory_space<vmem>>, vector<8x1xf32>,
    %c0_i32_38 = arith.constant 0 : i32
    %68 = arith.cmpi eq, %arg0, %c0_i32_38 : i32
    %69 = arith.extui %68 : i1 to i32
    %c0_i32_39 = arith.constant 0 : i32
    %70 = arith.cmpi ne, %69, %c0_i32_39 : i32
    scf.if %70 {
      %c0_40 = arith.constant 0 : index
      %c0_41 = arith.constant 0 : index
      %71 = vector.load %arg7[%c0_40, %c0_41] : memref<8x1xf32, #tpu.memory_space<vmem>>, vector<8x1xf32>
      %c0_42 = arith.constant 0 : index
      %c0_43 = arith.constant 0 : index
      %72 = vector.load %arg6[%c0_42, %c0_43] : memref<8x1xf32, #tpu.memory_space<vmem>>, vector<8x1xf32>
      tpu.vector_store %arg6[%c0_42, %c0_43], %71 {strides = array<i32>} : memref<8x1xf32, #tpu.memory_space<vmem>>, vector<8x1xf32>,
    } else {
    }
    return
  }
  func.func @transform_0(%arg0: i32, %arg1: memref<8xi32, #tpu.memory_space<smem>>, %arg2: memref<8xi32, #tpu.memory_space<smem>>) -> (i32, i32) {
    %c0_i32 = arith.constant 0 : i32
    %c0_i32_0 = arith.constant 0 : i32
    %c0_i32_1 = arith.constant 0 : i32
    return %c0_i32, %c0_i32_0 : i32, i32
  }
  func.func @transform_1(%arg0: i32, %arg1: memref<8xi32, #tpu.memory_space<smem>>, %arg2: memref<8xi32, #tpu.memory_space<smem>>) -> (i32, i32) {
    %c0_i32 = arith.constant 0 : i32
    %c0_i32_0 = arith.constant 0 : i32
    return %c0_i32, %arg0 : i32, i32
  }
  func.func @transform_2(%arg0: i32, %arg1: memref<8xi32, #tpu.memory_space<smem>>, %arg2: memref<8xi32, #tpu.memory_space<smem>>) -> (i32, i32) {
    %c0_i32 = arith.constant 0 : i32
    %c0_i32_0 = arith.constant 0 : i32
    return %c0_i32, %arg0 : i32, i32
  }
  func.func @transform_3(%arg0: i32, %arg1: memref<8xi32, #tpu.memory_space<smem>>, %arg2: memref<8xi32, #tpu.memory_space<smem>>) -> (i32, i32) {
    %c0_i32 = arith.constant 0 : i32
    %c0_i32_0 = arith.constant 0 : i32
    %c0_i32_1 = arith.constant 0 : i32
    return %c0_i32, %c0_i32_0 : i32, i32
  }
}

</mosaic_0001>

<llo_original>
// kernel: tpu_custom_call.1
$region0: #{tpu_custom_call.1}
  #allocation0 [shape = 'u32[]', space=smem, size = 0x4, offset = 0x4, fixed_abs, tag = 'smem constant byte address 0x4 - core index']
  #allocation1 [shape = 'u32[72,128]{1,0:T(1,128)}', space=vmem, size = 0x9000, scoped, tag = 'internal scratch']
  #allocation2 [shape = 'f32[8,1]{1,0:T(8,128)}', space=vmem, size = 0x1000, scoped, tag = 'scratch operand']
  #allocation3 [shape = 's32[1]{0}', space=sflag, size = 0x4, scoped, tag = 'scoped memory for tpu_custom_call.1']
  #allocation4 [shape = 'u8[512]{0}', space=smem, size = 0x200, scoped, tag = 'prefetched SMEM operand 0']
  #allocation5 [shape = 'u8[512]{0}', space=smem, size = 0x200, scoped, tag = 'prefetched SMEM operand 1']
  %s0 = inlined_call_operand.hbm [shape: s32[8], index: 0, kind: input, shape index: {}]
  %s1 = inlined_call_operand.hbm [shape: s32[8], index: 1, kind: input, shape index: {}]
  %s2 = inlined_call_operand.hbm [shape: f32[128,128], index: 2, kind: input, shape index: {}]
  %s3 = inlined_call_operand.hbm [shape: f32[128,128], index: 3, kind: input, shape index: {}]
  %s4 = inlined_call_operand.hbm [shape: f32[128,128], index: 4, kind: output, shape index: {0}]
  %s5 = inlined_call_operand.vmem [shape: f32[8,1], index: 5, kind: output, shape index: {1}]
  %6 = xla_tuple %s4, %s5
  %s7 = sld [smem:[#allocation0]]
  $region42: #{tpu_custom_call.1} parent=0
    _
  %s9 = ssub.s32 1, %s7
  %s10 = scalar_select 0, %s9, %s7
  %s12 = sshll.u32 %s0, 4
  %s13 = int_to_ptr.hbm [resolvable:$true] %s12
  %15 = dma.hbm_to_smem %s13, 16, [#allocation4], [#allocation3]
  %s17 = sshll.u32 %s1, 4
  %s18 = int_to_ptr.hbm [resolvable:$true] %s17
  %20 = dma.hbm_to_smem %s18, 16, [#allocation5], [#allocation3]
  %22 = dma.done [#allocation3], 32
  %23 = sfence
  $region1: #{tpu_custom_call.1} parent=0
    #allocation6 [shape = 'u8[65536]{0}', space=vmem, size = 0x10000, scoped, tag = 'input window, operand 2, single buffered']
    #allocation7 [shape = 's32[1]{0}', space=sflag, size = 0x4, scoped, tag = 'scoped memory for tpu_custom_call.1']
    #allocation8 [shape = 's32[1]{0}', space=sflag, size = 0x4, scoped, tag = 'scoped memory for tpu_custom_call.1']
    #allocation9 [shape = 'u8[65536]{0}', space=vmem, size = 0x10000, scoped, tag = 'input window, operand 3, single buffered']
    #allocation10 [shape = 's32[1]{0}', space=sflag, size = 0x4, scoped, tag = 'scoped memory for tpu_custom_call.1']
    #allocation11 [shape = 'u8[65536]{0}', space=vmem, size = 0x10000, scoped, tag = 'output window, operand 0, single buffered']
    %24 = vsyncpa [#allocation7], 0
    %25 = vsyncpa [#allocation10], 0
    %26 = vsyncpa [#allocation8], 0
    // Predicated region
    $region2: #{tpu_custom_call.1} parent=1 // pred_check
      _
    $region3: #{tpu_custom_call.1} parent=1 // pred_check_branch
      %28 = sbr.rel (0) target = $region5
    $region4: #{tpu_custom_call.1} parent=1 // pred_region
      %30 = vsyncadd [#allocation7], 0
      %s31 = sshll.u32 %s2, 4
      %s32 = int_to_ptr.hbm [resolvable:$true] %s31
      %s33 = sshll.u32 [#allocation6], 4
      %s34 = int_to_ptr.vmem [resolvable:$true] %s33
      %39 = dma.hbm_to_vmem [thread:$0]  %s32, 2048, %s34, [#allocation7], 128, 128, 8
    $region5: #{tpu_custom_call.1} parent=1 // pred_fallthru
      _
    // Predicated region
    $region6: #{tpu_custom_call.1} parent=1 // pred_check
      _
    $region7: #{tpu_custom_call.1} parent=1 // pred_check_branch
      %41 = sbr.rel (0) target = $region9
    $region8: #{tpu_custom_call.1} parent=1 // pred_region
      %43 = vsyncadd [#allocation10], 0
      %s44 = sshll.u32 %s3, 4
      %s45 = int_to_ptr.hbm [resolvable:$true] %s44
      %s46 = sshll.u32 [#allocation9], 4
      %s47 = int_to_ptr.vmem [resolvable:$true] %s46
      %52 = dma.hbm_to_vmem [thread:$0]  %s45, 2048, %s47, [#allocation10], 128, 128, 8
    $region9: #{tpu_custom_call.1} parent=1 // pred_fallthru
      _
    // Predicated region
    $region10: #{tpu_custom_call.1} parent=1 // pred_check
      _
    $region11: #{tpu_custom_call.1} parent=1 // pred_check_branch
      %54 = sbr.rel (0) target = $region13
    $region12: #{tpu_custom_call.1} parent=1 // pred_region
      %56 = dma.done [#allocation7], 2048
    $region13: #{tpu_custom_call.1} parent=1 // pred_fallthru
      _
    // Predicated region
    $region14: #{tpu_custom_call.1} parent=1 // pred_check
      _
    $region15: #{tpu_custom_call.1} parent=1 // pred_check_branch
      %58 = sbr.rel (0) target = $region17
    $region16: #{tpu_custom_call.1} parent=1 // pred_region
      %60 = dma.done [#allocation10], 2048
    $region17: #{tpu_custom_call.1} parent=1 // pred_fallthru
      _
    %p61 = scmp.eq.s32.totalorder 0, 0
    // Predicated region
    $region18: #{tpu_custom_call.1} parent=1 // pred_check
      %p62 = pneg %p61
    $region19: #{tpu_custom_call.1} parent=1 // pred_check_branch
      %64 = sbr.rel (%p62) target = $region21
    $region20: #{tpu_custom_call.1} parent=1 // pred_region
      %vm65 = vcmask 7168
      %66 = vst.msk [vmem:[#allocation2] sm:$0xff] %vm65, 0.0
    $region21: #{tpu_custom_call.1} parent=1 // pred_fallthru
      _
    %v67 = vld [vmem:[#allocation6] sm:$0xff]
    %v68 = vld [vmem:[#allocation6 + $0x8] sm:$0xff]
    %v69 = vld [vmem:[#allocation6 + $0x10] sm:$0xff]
    %v70 = vld [vmem:[#allocation6 + $0x18] sm:$0xff]
    %v71 = vld [vmem:[#allocation6 + $0x20] sm:$0xff]
    %v72 = vld [vmem:[#allocation6 + $0x28] sm:$0xff]
    %v73 = vld [vmem:[#allocation6 + $0x30] sm:$0xff]
    %v74 = vld [vmem:[#allocation6 + $0x38] sm:$0xff]
    %v75 = vld [vmem:[#allocation6 + $0x40] sm:$0xff]
    %v76 = vld [vmem:[#allocation6 + $0x48] sm:$0xff]
    %v77 = vld [vmem:[#allocation6 + $0x50] sm:$0xff]
    %v78 = vld [vmem:[#allocation6 + $0x58] sm:$0xff]
    %v79 = vld [vmem:[#allocation6 + $0x60] sm:$0xff]
    %v80 = vld [vmem:[#allocation6 + $0x68] sm:$0xff]
    %v81 = vld [vmem:[#allocation6 + $0x70] sm:$0xff]
    %v82 = vld [vmem:[#allocation6 + $0x78] sm:$0xff]
    %v83 = vld [vmem:[#allocation9] sm:$0xff]
    %v84 = vld [vmem:[#allocation9 + $0x8] sm:$0xff]
    %v85 = vld [vmem:[#allocation9 + $0x10] sm:$0xff]
    %v86 = vld [vmem:[#allocation9 + $0x18] sm:$0xff]
    %v87 = vld [vmem:[#allocation9 + $0x20] sm:$0xff]
    %v88 = vld [vmem:[#allocation9 + $0x28] sm:$0xff]
    %v89 = vld [vmem:[#allocation9 + $0x30] sm:$0xff]
    %v90 = vld [vmem:[#allocation9 + $0x38] sm:$0xff]
    %v91 = vld [vmem:[#allocation9 + $0x40] sm:$0xff]
    %v92 = vld [vmem:[#allocation9 + $0x48] sm:$0xff]
    %v93 = vld [vmem:[#allocation9 + $0x50] sm:$0xff]
    %v94 = vld [vmem:[#allocation9 + $0x58] sm:$0xff]
    %v95 = vld [vmem:[#allocation9 + $0x60] sm:$0xff]
    %v96 = vld [vmem:[#allocation9 + $0x68] sm:$0xff]
    %v97 = vld [vmem:[#allocation9 + $0x70] sm:$0xff]
    %v98 = vld [vmem:[#allocation9 + $0x78] sm:$0xff]
    %99 = vmatpush.msra.mxu0 %v98
    %100 = vmatpush.msra.mxu0 %v97
    %101 = vmatpush.msra.mxu0 %v96
    %102 = vmatpush.msra.mxu0 %v95
    %103 = vmatpush.msra.mxu0 %v94
    %104 = vmatpush.msra.mxu0 %v93
    %105 = vmatpush.msra.mxu0 %v92
    %106 = vmatpush.msra.mxu0 %v91
    %107 = vmatpush.msra.mxu0 %v90
    %108 = vmatpush.msra.mxu0 %v89
    %109 = vmatpush.msra.mxu0 %v88
    %110 = vmatpush.msra.mxu0 %v87
    %111 = vmatpush.msra.mxu0 %v86
    %112 = vmatpush.msra.mxu0 %v85
    %113 = vmatpush.msra.mxu0 %v84
    %114 = vmatpush.msra.mxu0 %v83
    %115 = vmatmul.f32.gmra.mxu0 %v67
    %v116 = vpop.f32.mrf.mxu0
    %v117 = vadd.f32 0.0, %v116
    %118 = vmatmul.f32.gmra.mxu0 %v68
    %v119 = vpop.f32.mrf.mxu0
    %v120 = vadd.f32 0.0, %v119
    %121 = vmatmul.f32.gmra.mxu0 %v69
    %v122 = vpop.f32.mrf.mxu0
    %v123 = vadd.f32 0.0, %v122
    %124 = vmatmul.f32.gmra.mxu0 %v70
    %v125 = vpop.f32.mrf.mxu0
    %v126 = vadd.f32 0.0, %v125
    %127 = vmatmul.f32.gmra.mxu0 %v71
    %v128 = vpop.f32.mrf.mxu0
    %v129 = vadd.f32 0.0, %v128
    %130 = vmatmul.f32.gmra.mxu0 %v72
    %v131 = vpop.f32.mrf.mxu0
    %v132 = vadd.f32 0.0, %v131
    %133 = vmatmul.f32.gmra.mxu0 %v73
    %v134 = vpop.f32.mrf.mxu0
    %v135 = vadd.f32 0.0, %v134
    %136 = vmatmul.f32.gmra.mxu0 %v74
    %v137 = vpop.f32.mrf.mxu0
    %v138 = vadd.f32 0.0, %v137
    %139 = vmatmul.f32.gmra.mxu0 %v75
    %v140 = vpop.f32.mrf.mxu0
    %v141 = vadd.f32 0.0, %v140
    %142 = vmatmul.f32.gmra.mxu0 %v76
    %v143 = vpop.f32.mrf.mxu0
    %v144 = vadd.f32 0.0, %v143
    %145 = vmatmul.f32.gmra.mxu0 %v77
    %v146 = vpop.f32.mrf.mxu0
    %v147 = vadd.f32 0.0, %v146
    %148 = vmatmul.f32.gmra.mxu0 %v78
    %v149 = vpop.f32.mrf.mxu0
    %v150 = vadd.f32 0.0, %v149
    %151 = vmatmul.f32.gmra.mxu0 %v79
    %v152 = vpop.f32.mrf.mxu0
    %v153 = vadd.f32 0.0, %v152
    %154 = vmatmul.f32.gmra.mxu0 %v80
    %v155 = vpop.f32.mrf.mxu0
    %v156 = vadd.f32 0.0, %v155
    %157 = vmatmul.f32.gmra.mxu0 %v81
    %v158 = vpop.f32.mrf.mxu0
    %v159 = vadd.f32 0.0, %v158
    %160 = vmatmul.f32.gmra.mxu0 %v82
    %v161 = vpop.f32.mrf.mxu0
    %v162 = vadd.f32 0.0, %v161
    %163 = vdwg.mxu0
    %v164 = vadd.f32 %v83, %v117
    %v165 = vadd.f32 %v84, %v120
    %v166 = vadd.f32 %v85, %v123
    %v167 = vadd.f32 %v86, %v126
    %v168 = vadd.f32 %v87, %v129
    %v169 = vadd.f32 %v88, %v132
    %v170 = vadd.f32 %v89, %v135
    %v171 = vadd.f32 %v90, %v138
    %v172 = vadd.f32 %v91, %v141
    %v173 = vadd.f32 %v92, %v144
    %v174 = vadd.f32 %v93, %v147
    %v175 = vadd.f32 %v94, %v150
    %v176 = vadd.f32 %v95, %v153
    %v177 = vadd.f32 %v96, %v156
    %v178 = vadd.f32 %v97, %v159
    %v179 = vadd.f32 %v98, %v162
    %180 = vmatpush.msra.mxu0 %v162
    %181 = vmatpush.msra.mxu0 %v159
    %182 = vmatpush.msra.mxu0 %v156
    %183 = vmatpush.msra.mxu0 %v153
    %184 = vmatpush.msra.mxu0 %v150
    %185 = vmatpush.msra.mxu0 %v147
    %186 = vmatpush.msra.mxu0 %v144
    %187 = vmatpush.msra.mxu0 %v141
    %188 = vmatpush.msra.mxu0 %v138
    %189 = vmatpush.msra.mxu0 %v135
    %190 = vmatpush.msra.mxu0 %v132
    %191 = vmatpush.msra.mxu0 %v129
    %192 = vmatpush.msra.mxu0 %v126
    %193 = vmatpush.msra.mxu0 %v123
    %194 = vmatpush.msra.mxu0 %v120
    %195 = vmatpush.msra.mxu0 %v117
    %196 = vmatmul.f32.gmra.mxu0 %v67
    %v197 = vpop.f32.mrf.mxu0
    %v198 = vadd.f32 0.0, %v197
    %199 = vmatmul.f32.gmra.mxu0 %v68
    %v200 = vpop.f32.mrf.mxu0
    %v201 = vadd.f32 0.0, %v200
    %202 = vmatmul.f32.gmra.mxu0 %v69
    %v203 = vpop.f32.mrf.mxu0
    %v204 = vadd.f32 0.0, %v203
    %205 = vmatmul.f32.gmra.mxu0 %v70
    %v206 = vpop.f32.mrf.mxu0
    %v207 = vadd.f32 0.0, %v206
    %208 = vmatmul.f32.gmra.mxu0 %v71
    %v209 = vpop.f32.mrf.mxu0
    %v210 = vadd.f32 0.0, %v209
    %211 = vmatmul.f32.gmra.mxu0 %v72
    %v212 = vpop.f32.mrf.mxu0
    %v213 = vadd.f32 0.0, %v212
    %214 = vmatmul.f32.gmra.mxu0 %v73
    %v215 = vpop.f32.mrf.mxu0
    %v216 = vadd.f32 0.0, %v215
    %217 = vmatmul.f32.gmra.mxu0 %v74
    %v218 = vpop.f32.mrf.mxu0
    %v219 = vadd.f32 0.0, %v218
    %220 = vmatmul.f32.gmra.mxu0 %v75
    %v221 = vpop.f32.mrf.mxu0
    %v222 = vadd.f32 0.0, %v221
    %223 = vmatmul.f32.gmra.mxu0 %v76
    %v224 = vpop.f32.mrf.mxu0
    %v225 = vadd.f32 0.0, %v224
    %226 = vmatmul.f32.gmra.mxu0 %v77
    %v227 = vpop.f32.mrf.mxu0
    %v228 = vadd.f32 0.0, %v227
    %229 = vmatmul.f32.gmra.mxu0 %v78
    %v230 = vpop.f32.mrf.mxu0
    %v231 = vadd.f32 0.0, %v230
    %232 = vmatmul.f32.gmra.mxu0 %v79
    %v233 = vpop.f32.mrf.mxu0
    %v234 = vadd.f32 0.0, %v233
    %235 = vmatmul.f32.gmra.mxu0 %v80
    %v236 = vpop.f32.mrf.mxu0
    %v237 = vadd.f32 0.0, %v236
    %238 = vmatmul.f32.gmra.mxu0 %v81
    %v239 = vpop.f32.mrf.mxu0
    %v240 = vadd.f32 0.0, %v239
    %241 = vmatmul.f32.gmra.mxu0 %v82
    %v242 = vpop.f32.mrf.mxu0
    %v243 = vadd.f32 0.0, %v242
    %244 = vdwg.mxu0
    %v245 = vadd.f32 %v164, %v198
    %v246 = vadd.f32 %v165, %v201
    %v247 = vadd.f32 %v166, %v204
    %v248 = vadd.f32 %v167, %v207
    %v249 = vadd.f32 %v168, %v210
    %v250 = vadd.f32 %v169, %v213
    %v251 = vadd.f32 %v170, %v216
    %v252 = vadd.f32 %v171, %v219
    %v253 = vadd.f32 %v172, %v222
    %v254 = vadd.f32 %v173, %v225
    %v255 = vadd.f32 %v174, %v228
    %v256 = vadd.f32 %v175, %v231
    %v257 = vadd.f32 %v176, %v234
    %v258 = vadd.f32 %v177, %v237
    %v259 = vadd.f32 %v178, %v240
    %v260 = vadd.f32 %v179, %v243
    %v261 = vmul.f32 %v245, 0.33333334
    %v262 = vmul.f32 %v246, 0.33333334
    %v263 = vmul.f32 %v247, 0.33333334
    %v264 = vmul.f32 %v248, 0.33333334
    %v265 = vmul.f32 %v249, 0.33333334
    %v266 = vmul.f32 %v250, 0.33333334
    %v267 = vmul.f32 %v251, 0.33333334
    %v268 = vmul.f32 %v252, 0.33333334
    %v269 = vmul.f32 %v253, 0.33333334
    %v270 = vmul.f32 %v254, 0.33333334
    %v271 = vmul.f32 %v255, 0.33333334
    %v272 = vmul.f32 %v256, 0.33333334
    %v273 = vmul.f32 %v257, 0.33333334
    %v274 = vmul.f32 %v258, 0.33333334
    %v275 = vmul.f32 %v259, 0.33333334
    %v276 = vmul.f32 %v260, 0.33333334
    %277 = vst [vmem:[#allocation11] sm:$0xff] %v261
    %278 = vst [vmem:[#allocation11 + $0x8] sm:$0xff] %v262
    %279 = vst [vmem:[#allocation11 + $0x10] sm:$0xff] %v263
    %280 = vst [vmem:[#allocation11 + $0x18] sm:$0xff] %v264
    %281 = vst [vmem:[#allocation11 + $0x20] sm:$0xff] %v265
    %282 = vst [vmem:[#allocation11 + $0x28] sm:$0xff] %v266
    %283 = vst [vmem:[#allocation11 + $0x30] sm:$0xff] %v267
    %284 = vst [vmem:[#allocation11 + $0x38] sm:$0xff] %v268
    %285 = vst [vmem:[#allocation11 + $0x40] sm:$0xff] %v269
    %286 = vst [vmem:[#allocation11 + $0x48] sm:$0xff] %v270
    %287 = vst [vmem:[#allocation11 + $0x50] sm:$0xff] %v271
    %288 = vst [vmem:[#allocation11 + $0x58] sm:$0xff] %v272
    %289 = vst [vmem:[#allocation11 + $0x60] sm:$0xff] %v273
    %290 = vst [vmem:[#allocation11 + $0x68] sm:$0xff] %v274
    %291 = vst [vmem:[#allocation11 + $0x70] sm:$0xff] %v275
    %292 = vst [vmem:[#allocation11 + $0x78] sm:$0xff] %v276
    %s293 = sld [smem:[#allocation4]]
    %s294 = scalar_lea.vmem [#allocation11], %s293
    %v295 = vld [vmem:[%s294] sm:$0x1]
    %s296 = sld [smem:[#allocation4 + $0x1]]
    %s297 = scalar_lea.vmem [#allocation11], %s296
    %v298 = vld [vmem:[%s297] sm:$0x1]
    %s299 = sld [smem:[#allocation4 + $0x2]]
    %s300 = scalar_lea.vmem [#allocation11], %s299
    %v301 = vld [vmem:[%s300] sm:$0x1]
    %s302 = sld [smem:[#allocation4 + $0x3]]
    %s303 = scalar_lea.vmem [#allocation11], %s302
    %v304 = vld [vmem:[%s303] sm:$0x1]
    %s305 = sld [smem:[#allocation4 + $0x4]]
    %s306 = scalar_lea.vmem [#allocation11], %s305
    %v307 = vld [vmem:[%s306] sm:$0x1]
    %s308 = sld [smem:[#allocation4 + $0x5]]
    %s309 = scalar_lea.vmem [#allocation11], %s308
    %v310 = vld [vmem:[%s309] sm:$0x1]
    %s311 = sld [smem:[#allocation4 + $0x6]]
    %s312 = scalar_lea.vmem [#allocation11], %s311
    %v313 = vld [vmem:[%s312] sm:$0x1]
    %s314 = sld [smem:[#allocation4 + $0x7]]
    %s315 = scalar_lea.vmem [#allocation11], %s314
    %v316 = vld [vmem:[%s315] sm:$0x1]
    %s317 = sld [smem:[#allocation5]]
    %s318 = scalar_lea.vmem [#allocation11], %s317
    %v319 = vld [vmem:[%s318] sm:$0x1]
    %s320 = sld [smem:[#allocation5 + $0x1]]
    %s321 = scalar_lea.vmem [#allocation11], %s320
    %v322 = vld [vmem:[%s321] sm:$0x1]
    %s323 = sld [smem:[#allocation5 + $0x2]]
    %s324 = scalar_lea.vmem [#allocation11], %s323
    %v325 = vld [vmem:[%s324] sm:$0x1]
    %s326 = sld [smem:[#allocation5 + $0x3]]
    %s327 = scalar_lea.vmem [#allocation11], %s326
    %v328 = vld [vmem:[%s327] sm:$0x1]
    %s329 = sld [smem:[#allocation5 + $0x4]]
    %s330 = scalar_lea.vmem [#allocation11], %s329
    %v331 = vld [vmem:[%s330] sm:$0x1]
    %s332 = sld [smem:[#allocation5 + $0x5]]
    %s333 = scalar_lea.vmem [#allocation11], %s332
    %v334 = vld [vmem:[%s333] sm:$0x1]
    %s335 = sld [smem:[#allocation5 + $0x6]]
    %s336 = scalar_lea.vmem [#allocation11], %s335
    %v337 = vld [vmem:[%s336] sm:$0x1]
    %s338 = sld [smem:[#allocation5 + $0x7]]
    %s339 = scalar_lea.vmem [#allocation11], %s338
    %v340 = vld [vmem:[%s339] sm:$0x1]
    %v342 = vrot.slane %v298, 7
    %v345 = vrot.slane %v301, 6
    %v348 = vrot.slane %v304, 5
    %v351 = vrot.slane %v307, 4
    %v354 = vrot.slane %v310, 3
    %v357 = vrot.slane %v313, 2
    %v360 = vrot.slane %v316, 1
    %vm362 = vcmask 1040384
    %v363 = vsel %vm362, %v295, %v342
    %vm364 = vcmask 1041408
    %v365 = vsel %vm364, %v363, %v345
    %vm366 = vcmask 1042432
    %v367 = vsel %vm366, %v365, %v348
    %vm368 = vcmask 1043456
    %v369 = vsel %vm368, %v367, %v351
    %vm370 = vcmask 1044480
    %v371 = vsel %vm370, %v369, %v354
    %vm372 = vcmask 1045504
    %v373 = vsel %vm372, %v371, %v357
    %vm374 = vcmask 1046528
    %v375 = vsel %vm374, %v373, %v360
    %v377 = vrot.slane %v322, 7
    %v380 = vrot.slane %v325, 6
    %v383 = vrot.slane %v328, 5
    %v386 = vrot.slane %v331, 4
    %v389 = vrot.slane %v334, 3
    %v392 = vrot.slane %v337, 2
    %v395 = vrot.slane %v340, 1
    %v397 = vsel %vm362, %v319, %v377
    %v398 = vsel %vm364, %v397, %v380
    %v399 = vsel %vm366, %v398, %v383
    %v400 = vsel %vm368, %v399, %v386
    %v401 = vsel %vm370, %v400, %v389
    %v402 = vsel %vm372, %v401, %v392
    %v403 = vsel %vm374, %v402, %v395
    %v404 = vld [vmem:[#allocation2] sm:$0xff]
    %v405 = vmul.f32 %v375, %v403
    %406 = vadd.xlane.f32.xlu0 %v405
    %v407 = vpop.xlane.xlu0 %406
    %v408 = vadd.f32 %v404, %v407
    %vm409 = vcmask 7168
    %410 = vst.msk [vmem:[#allocation2] sm:$0xff] %vm409, %v408
    // Predicated region
    $region22: #{tpu_custom_call.1} parent=1 // pred_check
      %p411 = pneg %p61
    $region23: #{tpu_custom_call.1} parent=1 // pred_check_branch
      %413 = sbr.rel (%p411) target = $region25
    $region24: #{tpu_custom_call.1} parent=1 // pred_region
      %v414 = vld [vmem:[#allocation2] sm:$0xff]
      %415 = vst.msk [vmem:[%s5] sm:$0xff] %vm409, %v414
    $region25: #{tpu_custom_call.1} parent=1 // pred_fallthru
      _
    // Predicated region
    $region26: #{tpu_custom_call.1} parent=1 // pred_check
      _
    $region27: #{tpu_custom_call.1} parent=1 // pred_check_branch
      %417 = sbr.rel (0) target = $region29
    $region28: #{tpu_custom_call.1} parent=1 // pred_region
      %419 = vsyncadd [#allocation8], 0
      %s420 = sshll.u32 [#allocation11], 4
      %s421 = int_to_ptr.vmem [resolvable:$true] %s420
      %s422 = sshll.u32 %s4, 4
      %s423 = int_to_ptr.hbm [resolvable:$true] %s422
      %428 = dma.vmem_to_hbm [thread:$0]  %s421, 2048, %s423, [#allocation8], 128, 128, 8
    $region29: #{tpu_custom_call.1} parent=1 // pred_fallthru
      _
    // Predicated region
    $region30: #{tpu_custom_call.1} parent=1 // pred_check
      _
    $region31: #{tpu_custom_call.1} parent=1 // pred_check_branch
      %430 = sbr.rel (0) target = $region33
    $region32: #{tpu_custom_call.1} parent=1 // pred_region
      _
    $region33: #{tpu_custom_call.1} parent=1 // pred_fallthru
      _
    // Predicated region
    $region34: #{tpu_custom_call.1} parent=1 // pred_check
      _
    $region35: #{tpu_custom_call.1} parent=1 // pred_check_branch
      %432 = sbr.rel (0) target = $region37
    $region36: #{tpu_custom_call.1} parent=1 // pred_region
      %434 = dma.done [#allocation8], 2048
    $region37: #{tpu_custom_call.1} parent=1 // pred_fallthru
      _
    // Predicated region
    $region38: #{tpu_custom_call.1} parent=1 // pred_check
      _
    $region39: #{tpu_custom_call.1} parent=1 // pred_check_branch
      %436 = sbr.rel (0) target = $region41
    $region40: #{tpu_custom_call.1} parent=1 // pred_region
      _
    $region41: #{tpu_custom_call.1} parent=1 // pred_fallthru
      _
    %437 = vsyncpa [#allocation7], 1
    %438 = vsyncpa [#allocation10], 1
    %439 = vsyncpa [#allocation8], 1

</llo_original>
